<compile_context>
chip_gen: v7x
topology: tpu7x:2x2x1
jax: 0.10.0
libtpu: 0.0.40
codegen_flags: <defaults>
</compile_context>

<pallas_src>
import functools

import jax
import jax.numpy as jnp
from jax.experimental import pallas as pl
from jax.experimental.pallas import tpu as pltpu

_LANE = 128  # padded lane width for every hidden layer in the weight blob


def _round_up(x, m):
    return ((x + m - 1) // m) * m


def _leaky_relu(x, negative_slope=0.01):
    return jnp.where(x >= 0, x, negative_slope * x)


def actor_kernel(x_ref, w_ref, b_ref, o_ref, *, s_pad, action_dim, action_bound):
    """One batch tile of the 4-layer actor MLP.

    x_ref : [TB, s_pad]           compute dtype (bf16 or f32)
    w_ref : [s_pad + 3*128, 128]  compute dtype, zero-padded packed weights
    b_ref : [8, 128]              f32, rows 0..3 = biases of layers 1..4
    o_ref : [TB, action_dim]      f32
    """
    cdt = w_ref.dtype
    r2 = s_pad
    r3 = s_pad + _LANE
    r4 = s_pad + 2 * _LANE

    def linear(h, row_start, rows, bias_row):
        acc = jnp.dot(h, w_ref[row_start:row_start + rows, :],
                      preferred_element_type=jnp.float32)
        return acc + b_ref[bias_row:bias_row + 1, :]

    x = x_ref[...]                                        # [TB, s_pad]
    h = _leaky_relu(linear(x, 0, s_pad, 0))               # fc1 -> [TB, 128]
    h = _leaky_relu(linear(h.astype(cdt), r2, _LANE, 1))  # fc2 -> [TB, 128]
    h = _leaky_relu(linear(h.astype(cdt), r3, _LANE, 2))  # fc3 -> [TB, 128]
    h = jnp.tanh(linear(h.astype(cdt), r4, _LANE, 3))     # fc4 -> [TB, 128]

    # tanh already bounds the output to (-1, 1); the clamp only changes
    # anything when action_bound < 1, so skip it at trace time otherwise.
    if action_bound < 1.0:
        h = jnp.clip(h, -action_bound, action_bound)

    o_ref[...] = h[:, :action_dim].astype(o_ref.dtype)


def pack_params(params, state_dim, s_pad, action_dim, compute_dtype):
    """Pack 4 weight matrices into one zero-padded [s_pad+3*128, 128] blob and
    the 4 biases into one [8, 128] f32 blob."""
    rows = s_pad + 3 * _LANE
    w_blob = jnp.zeros((rows, _LANE), jnp.float32)
    w_blob = w_blob.at[0:state_dim, 0:64].set(params["w1"])
    w_blob = w_blob.at[s_pad:s_pad + 64, 0:32].set(params["w2"])
    w_blob = w_blob.at[s_pad + _LANE:s_pad + _LANE + 32, 0:16].set(params["w3"])
    w_blob = w_blob.at[s_pad + 2 * _LANE:s_pad + 2 * _LANE + 16,
                       0:action_dim].set(params["w4"])

    b_blob = jnp.zeros((8, _LANE), jnp.float32)
    b_blob = b_blob.at[0, 0:64].set(params["b1"].reshape(-1))
    b_blob = b_blob.at[1, 0:32].set(params["b2"].reshape(-1))
    b_blob = b_blob.at[2, 0:16].set(params["b3"].reshape(-1))
    b_blob = b_blob.at[3, 0:action_dim].set(params["b4"].reshape(-1))

    return w_blob.astype(compute_dtype), b_blob


def actor_forward(state, params, action_bound, *, block_b=512,
                  compute_dtype=jnp.bfloat16):
    """state: [B, state_dim] f32.  params: dict of (w, b) per layer, weights
    stored [in, out].  Returns [B, action_dim] f32."""
    B, state_dim = state.shape
    action_dim = params["w4"].shape[1]

    # Feature padding aligned to the bf16 sublane tile (16); batch tile is a
    # multiple of 8 and at most block_b (default 512 ~ 85% of HBM roofline).
    s_pad = _round_up(state_dim, 16)
    tb = _round_up(min(block_b, _round_up(B, 8)), 8)
    n_blocks = pl.cdiv(B, tb)
    b_pad = n_blocks * tb

    w_blob, b_blob = pack_params(params, state_dim, s_pad, action_dim,
                                 compute_dtype)

    x = state.astype(compute_dtype)
    if (b_pad != B) or (s_pad != state_dim):
        x = jnp.pad(x, ((0, b_pad - B), (0, s_pad - state_dim)))

    kernel = functools.partial(actor_kernel, s_pad=s_pad,
                               action_dim=action_dim,
                               action_bound=float(action_bound))

    # VMEM footprint per grid step (bf16, tb=512): 2*(512*s_pad*2) state +
    # 2*(512*action_dim*4) out + ~100 KiB weights + a few [512,128] f32
    # temporaries -> well under the scoped default on every generation, so
    # no vmem_limit_bytes override is needed.
    out = pl.pallas_call(
        kernel,
        out_shape=jax.ShapeDtypeStruct((b_pad, action_dim), jnp.float32),
        grid_spec=pltpu.PrefetchScalarGridSpec(
            num_scalar_prefetch=0,
            grid=(n_blocks,),
            in_specs=[
                pl.BlockSpec((tb, s_pad), lambda i: (i, 0)),       # state tile
                pl.BlockSpec(w_blob.shape, lambda i: (0, 0)),      # resident
                pl.BlockSpec(b_blob.shape, lambda i: (0, 0)),      # resident
            ],
            out_specs=pl.BlockSpec((tb, action_dim), lambda i: (i, 0)),
        ),
        compiler_params=pltpu.CompilerParams(
            dimension_semantics=("parallel",)),
    )(x, w_blob, b_blob)

    return out[:B]


def init_params(key, state_dim, action_dim):
    """Deterministic init mimicking nn.Linear (uniform +-1/sqrt(fan_in)).
    Weights stored as [in, out]."""
    dims = [(state_dim, 64), (64, 32), (32, 16), (16, action_dim)]
    params = {}
    for i, (fan_in, fan_out) in enumerate(dims, start=1):
        key, kw, kb = jax.random.split(key, 3)
        bound = 1.0 / jnp.sqrt(fan_in)
        params[f"w{i}"] = jax.random.uniform(
            kw, (fan_in, fan_out), jnp.float32, -bound, bound)
        params[f"b{i}"] = jax.random.uniform(
            kb, (1, fan_out), jnp.float32, -bound, bound)
    return params


def actor_reference(state, params, action_bound):
    """Pure-JAX reference for correctness checking."""
    h = state
    for i in range(1, 4):
        h = h @ params[f"w{i}"] + params[f"b{i}"]
        h = jnp.where(h >= 0, h, 0.01 * h)
    h = jnp.tanh(h @ params["w4"] + params["b4"])
    return jnp.clip(h, -action_bound, action_bound)


if __name__ == "__main__":
    state_dim = 16
    action_dim = 4
    action_bound = 2.0

    key = jax.random.PRNGKey(0)
    k_params, k_state = jax.random.split(key)
    params = init_params(k_params, state_dim, action_dim)

    # --- Check 1: single tile, f32 compute path (exact vs reference). ---
    B = 8
    state = jax.random.normal(k_state, (B, state_dim), jnp.float32)
    ref = actor_reference(state, params, action_bound)

    out_f32 = jax.block_until_ready(
        actor_forward(state, params, action_bound, compute_dtype=jnp.float32))
    assert out_f32.shape == (B, action_dim)
    assert jnp.allclose(out_f32, ref, atol=1e-5, rtol=1e-5), "f32 mismatch"

    # --- Check 2: default bf16 fast path (looser tolerance). ---
    out_bf16 = jax.block_until_ready(actor_forward(state, params, action_bound))
    assert out_bf16.shape == (B, action_dim)
    assert jnp.allclose(out_bf16, ref, atol=5e-2, rtol=5e-2), "bf16 mismatch"

    # --- Check 3: multi-step batch grid with ragged batch (padding path). ---
    B2 = 20
    state2 = jax.random.normal(jax.random.PRNGKey(1), (B2, state_dim),
                               jnp.float32)
    ref2 = actor_reference(state2, params, action_bound)
    out2 = jax.block_until_ready(
        actor_forward(state2, params, action_bound, block_b=16))  # grid=(2,)
    assert out2.shape == (B2, action_dim)
    assert jnp.allclose(out2, ref2, atol=5e-2, rtol=5e-2), "tiled mismatch"

    print("KERNEL_OK")
</pallas_src>

<mosaic_0001>
module attributes {stable_mosaic.version = 11 : i64} {
  func.func @actor_kernel(%arg0: i32, %arg1: memref<8x16xf32, #tpu.memory_space<vmem>>, %arg2: memref<400x128xf32, #tpu.memory_space<vmem>>, %arg3: memref<8x128xf32, #tpu.memory_space<vmem>>, %arg4: memref<8x4xf32, #tpu.memory_space<vmem>>) attributes {dimension_semantics = [#tpu.dimension_semantics<parallel>], iteration_bounds = array<i64: 1>, scalar_prefetch = 0 : i64, scratch_operands = 0 : i64, tpu.core_type = #tpu.core_type<tc>, window_params = [{transform_indices = @transform_0, window_bounds = array<i64: 8, 16>}, {pipeline_mode = #tpu.pipeline_mode<synchronous>, transform_indices = @transform_1, window_bounds = array<i64: 400, 128>}, {pipeline_mode = #tpu.pipeline_mode<synchronous>, transform_indices = @transform_2, window_bounds = array<i64: 8, 128>}, {transform_indices = @transform_3, window_bounds = array<i64: 8, 4>}]} {
    %c0 = arith.constant 0 : index
    %c0_0 = arith.constant 0 : index
    %0 = vector.load %arg1[%c0, %c0_0] : memref<8x16xf32, #tpu.memory_space<vmem>>, vector<8x16xf32>
    %c0_1 = arith.constant 0 : index
    %c0_2 = arith.constant 0 : index
    %1 = vector.load %arg2[%c0_1, %c0_2] : memref<400x128xf32, #tpu.memory_space<vmem>>, vector<16x128xf32>
    %cst = arith.constant dense<0.000000e+00> : vector<8x128xf32>
    %2 = tpu.matmul %0, %1, %cst {dimension_numbers = #tpu.dot_dimension_numbers<[1], [0], [0], [1], [0, 0, 1, 1], [], []>} : vector<8x16xf32>, vector<16x128xf32>, vector<8x128xf32> -> vector<8x128xf32>
    %c0_3 = arith.constant 0 : index
    %c0_4 = arith.constant 0 : index
    %3 = vector.load %arg3[%c0_3, %c0_4] : memref<8x128xf32, #tpu.memory_space<vmem>>, vector<1x128xf32>
    %4 = vector.broadcast %3 : vector<1x128xf32> to vector<8x128xf32>
    %5 = arith.addf %2, %4 : vector<8x128xf32>
    %cst_5 = arith.constant 0.000000e+00 : f32
    %6 = vector.broadcast %cst_5 : f32 to vector<8x128xf32>
    %7 = arith.cmpf oge, %5, %6 : vector<8x128xf32>
    %cst_6 = arith.constant 0.00999999977 : f32
    %8 = vector.broadcast %cst_6 : f32 to vector<8x128xf32>
    %9 = arith.mulf %8, %5 : vector<8x128xf32>
    %10 = arith.select %7, %5, %9 : vector<8x128xi1>, vector<8x128xf32>
    %c16 = arith.constant 16 : index
    %c0_7 = arith.constant 0 : index
    %11 = vector.load %arg2[%c16, %c0_7] : memref<400x128xf32, #tpu.memory_space<vmem>>, vector<128x128xf32>
    %cst_8 = arith.constant dense<0.000000e+00> : vector<8x128xf32>
    %12 = tpu.matmul %10, %11, %cst_8 {dimension_numbers = #tpu.dot_dimension_numbers<[1], [0], [0], [1], [0, 0, 1, 1], [], []>} : vector<8x128xf32>, vector<128x128xf32>, vector<8x128xf32> -> vector<8x128xf32>
    %c1 = arith.constant 1 : index
    %c0_9 = arith.constant 0 : index
    %13 = vector.load %arg3[%c1, %c0_9] : memref<8x128xf32, #tpu.memory_space<vmem>>, vector<1x128xf32>
    %14 = vector.broadcast %13 : vector<1x128xf32> to vector<8x128xf32>
    %15 = arith.addf %12, %14 : vector<8x128xf32>
    %cst_10 = arith.constant 0.000000e+00 : f32
    %16 = vector.broadcast %cst_10 : f32 to vector<8x128xf32>
    %17 = arith.cmpf oge, %15, %16 : vector<8x128xf32>
    %cst_11 = arith.constant 0.00999999977 : f32
    %18 = vector.broadcast %cst_11 : f32 to vector<8x128xf32>
    %19 = arith.mulf %18, %15 : vector<8x128xf32>
    %20 = arith.select %17, %15, %19 : vector<8x128xi1>, vector<8x128xf32>
    %c144 = arith.constant 144 : index
    %c0_12 = arith.constant 0 : index
    %21 = vector.load %arg2[%c144, %c0_12] : memref<400x128xf32, #tpu.memory_space<vmem>>, vector<128x128xf32>
    %cst_13 = arith.constant dense<0.000000e+00> : vector<8x128xf32>
    %22 = tpu.matmul %20, %21, %cst_13 {dimension_numbers = #tpu.dot_dimension_numbers<[1], [0], [0], [1], [0, 0, 1, 1], [], []>} : vector<8x128xf32>, vector<128x128xf32>, vector<8x128xf32> -> vector<8x128xf32>
    %c2 = arith.constant 2 : index
    %c0_14 = arith.constant 0 : index
    %23 = vector.load %arg3[%c2, %c0_14] : memref<8x128xf32, #tpu.memory_space<vmem>>, vector<1x128xf32>
    %24 = vector.broadcast %23 : vector<1x128xf32> to vector<8x128xf32>
    %25 = arith.addf %22, %24 : vector<8x128xf32>
    %cst_15 = arith.constant 0.000000e+00 : f32
    %26 = vector.broadcast %cst_15 : f32 to vector<8x128xf32>
    %27 = arith.cmpf oge, %25, %26 : vector<8x128xf32>
    %cst_16 = arith.constant 0.00999999977 : f32
    %28 = vector.broadcast %cst_16 : f32 to vector<8x128xf32>
    %29 = arith.mulf %28, %25 : vector<8x128xf32>
    %30 = arith.select %27, %25, %29 : vector<8x128xi1>, vector<8x128xf32>
    %c272 = arith.constant 272 : index
    %c0_17 = arith.constant 0 : index
    %31 = vector.load %arg2[%c272, %c0_17] : memref<400x128xf32, #tpu.memory_space<vmem>>, vector<128x128xf32>
    %cst_18 = arith.constant dense<0.000000e+00> : vector<8x128xf32>
    %32 = tpu.matmul %30, %31, %cst_18 {dimension_numbers = #tpu.dot_dimension_numbers<[1], [0], [0], [1], [0, 0, 1, 1], [], []>} : vector<8x128xf32>, vector<128x128xf32>, vector<8x128xf32> -> vector<8x128xf32>
    %c3 = arith.constant 3 : index
    %c0_19 = arith.constant 0 : index
    %33 = vector.load %arg3[%c3, %c0_19] : memref<8x128xf32, #tpu.memory_space<vmem>>, vector<1x128xf32>
    %34 = vector.broadcast %33 : vector<1x128xf32> to vector<8x128xf32>
    %35 = arith.addf %32, %34 : vector<8x128xf32>
    %36 = math.tanh %35 : vector<8x128xf32>
    %37 = vector.extract_strided_slice %36 {offsets = [0, 0], sizes = [8, 4], strides = [1, 1]} : vector<8x128xf32> to vector<8x4xf32>
    %c0_20 = arith.constant 0 : index
    %c0_21 = arith.constant 0 : index
    %38 = vector.load %arg4[%c0_20, %c0_21] : memref<8x4xf32, #tpu.memory_space<vmem>>, vector<8x4xf32>
    tpu.vector_store %arg4[%c0_20, %c0_21], %37 {strides = array<i32>} : memref<8x4xf32, #tpu.memory_space<vmem>>, vector<8x4xf32>,
    return
  }
  func.func @transform_0(%arg0: i32) -> (i32, i32) {
    %c0_i32 = arith.constant 0 : i32
    %c0_i32_0 = arith.constant 0 : i32
    return %arg0, %c0_i32 : i32, i32
  }
  func.func @transform_1(%arg0: i32) -> (i32, i32) {
    %c0_i32 = arith.constant 0 : i32
    %c0_i32_0 = arith.constant 0 : i32
    %c0_i32_1 = arith.constant 0 : i32
    return %c0_i32, %c0_i32_0 : i32, i32
  }
  func.func @transform_2(%arg0: i32) -> (i32, i32) {
    %c0_i32 = arith.constant 0 : i32
    %c0_i32_0 = arith.constant 0 : i32
    %c0_i32_1 = arith.constant 0 : i32
    return %c0_i32, %c0_i32_0 : i32, i32
  }
  func.func @transform_3(%arg0: i32) -> (i32, i32) {
    %c0_i32 = arith.constant 0 : i32
    %c0_i32_0 = arith.constant 0 : i32
    return %arg0, %c0_i32 : i32, i32
  }
}

</mosaic_0001>

<llo_original>
// kernel: tpu_custom_call.1
$region0: #{tpu_custom_call.1}
  #allocation0 [shape = 'u32[]', space=smem, size = 0x4, offset = 0x4, fixed_abs, tag = 'smem constant byte address 0x4 - core index']
  #allocation1 [shape = 'u32[144,128]{1,0:T(1,128)}', space=vmem, size = 0x12000, scoped, tag = 'internal scratch']
  %s0 = inlined_call_operand.hbm [shape: f32[8,16], index: 0, kind: input, shape index: {}]
  %s1 = inlined_call_operand.hbm [shape: f32[400,128], index: 1, kind: input, shape index: {}]
  %s2 = inlined_call_operand.hbm [shape: f32[8,128], index: 2, kind: input, shape index: {}]
  %s3 = inlined_call_operand.vmem [shape: f32[8,4], index: 3, kind: output, shape index: {}]
  %s4 = sld [smem:[#allocation0]]
  $region34: #{tpu_custom_call.1} parent=0
    _
  %s6 = ssub.s32 1, %s4
  %s7 = scalar_select 0, %s6, %s4
  $region1: #{tpu_custom_call.1} parent=0
    #allocation2 [shape = 'u8[4096]{0}', space=vmem, size = 0x1000, scoped, tag = 'input window, operand 0, single buffered']
    #allocation3 [shape = 's32[1]{0}', space=sflag, size = 0x4, scoped, tag = 'scoped memory for tpu_custom_call.1']
    #allocation4 [shape = 'u8[204800]{0}', space=vmem, size = 0x32000, scoped, tag = 'input window, operand 1, single buffered']
    #allocation5 [shape = 's32[1]{0}', space=sflag, size = 0x4, scoped, tag = 'scoped memory for tpu_custom_call.1']
    #allocation6 [shape = 'u8[4096]{0}', space=vmem, size = 0x1000, scoped, tag = 'input window, operand 2, single buffered']
    %8 = vsyncpa [#allocation3], 0
    %9 = vsyncpa [#allocation5], 0
    // Predicated region
    $region2: #{tpu_custom_call.1} parent=1 // pred_check
      _
    $region3: #{tpu_custom_call.1} parent=1 // pred_check_branch
      %11 = sbr.rel (0) target = $region5
    $region4: #{tpu_custom_call.1} parent=1 // pred_region
      %s13 = ssub.s32 128, 128
      %14 = vsyncadd [#allocation3], %s13
      %s16 = sshll.u32 [#allocation2], 4
      %s17 = int_to_ptr.vmem [resolvable:$true] %s16
      %19 = dma.hbm_to_vmem [thread:$0]  %s0, 128, %s17, [#allocation3]
    $region5: #{tpu_custom_call.1} parent=1 // pred_fallthru
      _
    // Predicated region
    $region6: #{tpu_custom_call.1} parent=1 // pred_check
      _
    $region7: #{tpu_custom_call.1} parent=1 // pred_check_branch
      %21 = sbr.rel (0) target = $region9
    $region8: #{tpu_custom_call.1} parent=1 // pred_region
      %s23 = ssub.s32 6400, 6400
      %24 = vsyncadd [#allocation5], %s23
      %s25 = sshll.u32 [#allocation4], 4
      %s26 = int_to_ptr.vmem [resolvable:$true] %s25
      %31 = dma.hbm_to_vmem [thread:$0]  %s1, 6400, %s26, [#allocation5], 128, 128, 8
    $region9: #{tpu_custom_call.1} parent=1 // pred_fallthru
      _
    // Predicated region
    $region10: #{tpu_custom_call.1} parent=1 // pred_check
      _
    $region11: #{tpu_custom_call.1} parent=1 // pred_check_branch
      %33 = sbr.rel (0) target = $region13
    $region12: #{tpu_custom_call.1} parent=1 // pred_region
      %s35 = ssub.s32 128, 128
      %36 = vsyncadd [#allocation5], %s35
      %s38 = sshll.u32 [#allocation6], 4
      %s39 = int_to_ptr.vmem [resolvable:$true] %s38
      %41 = dma.hbm_to_vmem [thread:$0]  %s2, 128, %s39, [#allocation5]
    $region13: #{tpu_custom_call.1} parent=1 // pred_fallthru
      _
    // Predicated region
    $region14: #{tpu_custom_call.1} parent=1 // pred_check
      _
    $region15: #{tpu_custom_call.1} parent=1 // pred_check_branch
      %43 = sbr.rel (0) target = $region17
    $region16: #{tpu_custom_call.1} parent=1 // pred_region
      %44 = dma.done [#allocation3], 128
    $region17: #{tpu_custom_call.1} parent=1 // pred_fallthru
      _
    // Predicated region
    $region18: #{tpu_custom_call.1} parent=1 // pred_check
      _
    $region19: #{tpu_custom_call.1} parent=1 // pred_check_branch
      %46 = sbr.rel (0) target = $region21
    $region20: #{tpu_custom_call.1} parent=1 // pred_region
      %47 = dma.done [#allocation5], 6400
    $region21: #{tpu_custom_call.1} parent=1 // pred_fallthru
      _
    // Predicated region
    $region22: #{tpu_custom_call.1} parent=1 // pred_check
      _
    $region23: #{tpu_custom_call.1} parent=1 // pred_check_branch
      %49 = sbr.rel (0) target = $region25
    $region24: #{tpu_custom_call.1} parent=1 // pred_region
      %50 = dma.done [#allocation5], 128
    $region25: #{tpu_custom_call.1} parent=1 // pred_fallthru
      _
    %v51 = vld [vmem:[#allocation2] sm:$0xff]
    %v52 = vld [vmem:[#allocation4] sm:$0xff]
    %v53 = vld [vmem:[#allocation4 + $0x8] sm:$0xff]
    %v54 = vld [vmem:[#allocation6] sm:$0x1]
    %v55 = vlaneseq
    %v56 = vshrl.u32 %v55, 7
    %v57 = vsub.s32 0, %v56
    %v58 = vrot.slane %v54, %v57
    %vm59 = vcmask 130048
    %v61 = vsel %vm59, %v51, 0
    %63 = vmatprep.subr.mxu0 0.0
    %64 = vmatpush1.msra.mxu0 %v52
    %65 = vmatprep.subr.mxu0 0.0
    %66 = vmatpush1.msra.mxu0 %v53
    %67 = vmatprep.subr.mxu0 0.0
    %68 = vmatpush1.msra.mxu0 0.0
    %69 = vmatprep.subr.mxu0 0.0
    %70 = vmatpush1.msra.mxu0 0.0
    %71 = vmatprep.subr.mxu0 0.0
    %72 = vmatpush1.msra.mxu0 0.0
    %73 = vmatprep.subr.mxu0 0.0
    %74 = vmatpush1.msra.mxu0 0.0
    %75 = vmatprep.subr.mxu0 0.0
    %76 = vmatpush1.msra.mxu0 0.0
    %77 = vmatprep.subr.mxu0 0.0
    %78 = vmatpush1.msra.mxu0 0.0
    %79 = vmatprep.subr.mxu0 0.0
    %80 = vmatpush1.msra.mxu0 0.0
    %81 = vmatprep.subr.mxu0 0.0
    %82 = vmatpush1.msra.mxu0 0.0
    %83 = vmatprep.subr.mxu0 0.0
    %84 = vmatpush1.msra.mxu0 0.0
    %85 = vmatprep.subr.mxu0 0.0
    %86 = vmatpush1.msra.mxu0 0.0
    %87 = vmatprep.subr.mxu0 0.0
    %88 = vmatpush1.msra.mxu0 0.0
    %89 = vmatprep.subr.mxu0 0.0
    %90 = vmatpush1.msra.mxu0 0.0
    %91 = vmatprep.subr.mxu0 0.0
    %92 = vmatpush1.msra.mxu0 0.0
    %93 = vmatprep.subr.mxu0 0.0
    %94 = vmatpush1.msra.mxu0 0.0
    %95 = vmatprep.subr.mxu0 0.0
    %96 = vmatpush1.msra.mxu0 0.0
    %97 = vmatprep.subr.mxu0 0.0
    %98 = vmatpush1.msra.mxu0 0.0
    %99 = vmatprep.subr.mxu0 0.0
    %100 = vmatpush1.msra.mxu0 0.0
    %101 = vmatprep.subr.mxu0 0.0
    %102 = vmatpush1.msra.mxu0 0.0
    %103 = vmatprep.subr.mxu0 0.0
    %104 = vmatpush1.msra.mxu0 0.0
    %105 = vmatprep.subr.mxu0 0.0
    %106 = vmatpush1.msra.mxu0 0.0
    %107 = vmatprep.subr.mxu0 0.0
    %108 = vmatpush1.msra.mxu0 0.0
    %109 = vmatprep.subr.mxu0 0.0
    %110 = vmatpush1.msra.mxu0 0.0
    %111 = vmatprep.subr.mxu0 0.0
    %112 = vmatpush1.msra.mxu0 0.0
    %113 = vmatprep.subr.mxu0 0.0
    %114 = vmatpush1.msra.mxu0 0.0
    %115 = vmatprep.subr.mxu0 0.0
    %116 = vmatpush1.msra.mxu0 0.0
    %117 = vmatprep.subr.mxu0 0.0
    %118 = vmatpush1.msra.mxu0 0.0
    %119 = vmatprep.subr.mxu0 0.0
    %120 = vmatpush1.msra.mxu0 0.0
    %121 = vmatprep.subr.mxu0 0.0
    %122 = vmatpush1.msra.mxu0 0.0
    %123 = vmatprep.subr.mxu0 0.0
    %124 = vmatpush1.msra.mxu0 0.0
    %125 = vmatprep.subr.mxu0 0.0
    %126 = vmatpush1.msra.mxu0 0.0
    %127 = vmatprep.mubr.f32.mxu0 0.0
    %128 = vmatmul.mubr.f32.gmra.mrb[0].mxu0 %v61
    %v129 = vpop.f32.mrb[0].mxu0
    %v130 = vadd.f32 %v58, %v129
    %v131 = vpop.f32.mrb[0].mxu0
    %132 = vdwg.mxu0
    %vm133 = vcmp.ge.f32.partialorder %v130, 0.0
    %v134 = vmul.f32 %v130, 0.01
    %v135 = vsel %vm133, %v130, %v134
    %v136 = vld [vmem:[#allocation4 + $0x10] sm:$0xff]
    %v137 = vld [vmem:[#allocation4 + $0x18] sm:$0xff]
    %v138 = vld [vmem:[#allocation4 + $0x20] sm:$0xff]
    %v139 = vld [vmem:[#allocation4 + $0x28] sm:$0xff]
    %v140 = vld [vmem:[#allocation4 + $0x30] sm:$0xff]
    %v141 = vld [vmem:[#allocation4 + $0x38] sm:$0xff]
    %v142 = vld [vmem:[#allocation4 + $0x40] sm:$0xff]
    %v143 = vld [vmem:[#allocation4 + $0x48] sm:$0xff]
    %v144 = vld [vmem:[#allocation4 + $0x50] sm:$0xff]
    %v145 = vld [vmem:[#allocation4 + $0x58] sm:$0xff]
    %v146 = vld [vmem:[#allocation4 + $0x60] sm:$0xff]
    %v147 = vld [vmem:[#allocation4 + $0x68] sm:$0xff]
    %v148 = vld [vmem:[#allocation4 + $0x70] sm:$0xff]
    %v149 = vld [vmem:[#allocation4 + $0x78] sm:$0xff]
    %v150 = vld [vmem:[#allocation4 + $0x80] sm:$0xff]
    %v151 = vld [vmem:[#allocation4 + $0x88] sm:$0xff]
    %v152 = vld [vmem:[#allocation6 + $0x1] sm:$0x1]
    %v153 = vlaneseq
    %v154 = vshrl.u32 %v153, 7
    %v155 = vsub.s32 0, %v154
    %v156 = vrot.slane %v152, %v155
    %157 = vmatprep.subr.mxu0 0.0
    %158 = vmatpush1.msra.mxu0 %v136
    %159 = vmatprep.subr.mxu0 0.0
    %160 = vmatpush1.msra.mxu0 %v137
    %161 = vmatprep.subr.mxu0 0.0
    %162 = vmatpush1.msra.mxu0 %v138
    %163 = vmatprep.subr.mxu0 0.0
    %164 = vmatpush1.msra.mxu0 %v139
    %165 = vmatprep.subr.mxu0 0.0
    %166 = vmatpush1.msra.mxu0 %v140
    %167 = vmatprep.subr.mxu0 0.0
    %168 = vmatpush1.msra.mxu0 %v141
    %169 = vmatprep.subr.mxu0 0.0
    %170 = vmatpush1.msra.mxu0 %v142
    %171 = vmatprep.subr.mxu0 0.0
    %172 = vmatpush1.msra.mxu0 %v143
    %173 = vmatprep.subr.mxu0 0.0
    %174 = vmatpush1.msra.mxu0 %v144
    %175 = vmatprep.subr.mxu0 0.0
    %176 = vmatpush1.msra.mxu0 %v145
    %177 = vmatprep.subr.mxu0 0.0
    %178 = vmatpush1.msra.mxu0 %v146
    %179 = vmatprep.subr.mxu0 0.0
    %180 = vmatpush1.msra.mxu0 %v147
    %181 = vmatprep.subr.mxu0 0.0
    %182 = vmatpush1.msra.mxu0 %v148
    %183 = vmatprep.subr.mxu0 0.0
    %184 = vmatpush1.msra.mxu0 %v149
    %185 = vmatprep.subr.mxu0 0.0
    %186 = vmatpush1.msra.mxu0 %v150
    %187 = vmatprep.subr.mxu0 0.0
    %188 = vmatpush1.msra.mxu0 %v151
    %189 = vmatprep.subr.mxu0 0.0
    %190 = vmatpush1.msra.mxu0 0.0
    %191 = vmatprep.subr.mxu0 0.0
    %192 = vmatpush1.msra.mxu0 0.0
    %193 = vmatprep.subr.mxu0 0.0
    %194 = vmatpush1.msra.mxu0 0.0
    %195 = vmatprep.subr.mxu0 0.0
    %196 = vmatpush1.msra.mxu0 0.0
    %197 = vmatprep.subr.mxu0 0.0
    %198 = vmatpush1.msra.mxu0 0.0
    %199 = vmatprep.subr.mxu0 0.0
    %200 = vmatpush1.msra.mxu0 0.0
    %201 = vmatprep.subr.mxu0 0.0
    %202 = vmatpush1.msra.mxu0 0.0
    %203 = vmatprep.subr.mxu0 0.0
    %204 = vmatpush1.msra.mxu0 0.0
    %205 = vmatprep.subr.mxu0 0.0
    %206 = vmatpush1.msra.mxu0 0.0
    %207 = vmatprep.subr.mxu0 0.0
    %208 = vmatpush1.msra.mxu0 0.0
    %209 = vmatprep.subr.mxu0 0.0
    %210 = vmatpush1.msra.mxu0 0.0
    %211 = vmatprep.subr.mxu0 0.0
    %212 = vmatpush1.msra.mxu0 0.0
    %213 = vmatprep.subr.mxu0 0.0
    %214 = vmatpush1.msra.mxu0 0.0
    %215 = vmatprep.subr.mxu0 0.0
    %216 = vmatpush1.msra.mxu0 0.0
    %217 = vmatprep.subr.mxu0 0.0
    %218 = vmatpush1.msra.mxu0 0.0
    %219 = vmatprep.subr.mxu0 0.0
    %220 = vmatpush1.msra.mxu0 0.0
    %221 = vmatprep.mubr.f32.mxu0 0.0
    %222 = vmatmul.mubr.f32.gmra.mrb[0].mxu0 %v135
    %v223 = vpop.f32.mrb[0].mxu0
    %v224 = vadd.f32 %v156, %v223
    %v225 = vpop.f32.mrb[0].mxu0
    %226 = vdwg.mxu0
    %vm227 = vcmp.ge.f32.partialorder %v224, 0.0
    %v228 = vmul.f32 %v224, 0.01
    %v229 = vsel %vm227, %v224, %v228
    %v230 = vld [vmem:[#allocation4 + $0x90] sm:$0xff]
    %v231 = vld [vmem:[#allocation4 + $0x98] sm:$0xff]
    %v232 = vld [vmem:[#allocation4 + $0xa0] sm:$0xff]
    %v233 = vld [vmem:[#allocation4 + $0xa8] sm:$0xff]
    %v234 = vld [vmem:[#allocation4 + $0xb0] sm:$0xff]
    %v235 = vld [vmem:[#allocation4 + $0xb8] sm:$0xff]
    %v236 = vld [vmem:[#allocation4 + $0xc0] sm:$0xff]
    %v237 = vld [vmem:[#allocation4 + $0xc8] sm:$0xff]
    %v238 = vld [vmem:[#allocation4 + $0xd0] sm:$0xff]
    %v239 = vld [vmem:[#allocation4 + $0xd8] sm:$0xff]
    %v240 = vld [vmem:[#allocation4 + $0xe0] sm:$0xff]
    %v241 = vld [vmem:[#allocation4 + $0xe8] sm:$0xff]
    %v242 = vld [vmem:[#allocation4 + $0xf0] sm:$0xff]
    %v243 = vld [vmem:[#allocation4 + $0xf8] sm:$0xff]
    %v244 = vld [vmem:[#allocation4 + $0x100] sm:$0xff]
    %v245 = vld [vmem:[#allocation4 + $0x108] sm:$0xff]
    %v246 = vld [vmem:[#allocation6 + $0x2] sm:$0x1]
    %v247 = vlaneseq
    %v248 = vshrl.u32 %v247, 7
    %v249 = vsub.s32 0, %v248
    %v250 = vrot.slane %v246, %v249
    %251 = vmatprep.subr.mxu0 0.0
    %252 = vmatpush1.msra.mxu0 %v230
    %253 = vmatprep.subr.mxu0 0.0
    %254 = vmatpush1.msra.mxu0 %v231
    %255 = vmatprep.subr.mxu0 0.0
    %256 = vmatpush1.msra.mxu0 %v232
    %257 = vmatprep.subr.mxu0 0.0
    %258 = vmatpush1.msra.mxu0 %v233
    %259 = vmatprep.subr.mxu0 0.0
    %260 = vmatpush1.msra.mxu0 %v234
    %261 = vmatprep.subr.mxu0 0.0
    %262 = vmatpush1.msra.mxu0 %v235
    %263 = vmatprep.subr.mxu0 0.0
    %264 = vmatpush1.msra.mxu0 %v236
    %265 = vmatprep.subr.mxu0 0.0
    %266 = vmatpush1.msra.mxu0 %v237
    %267 = vmatprep.subr.mxu0 0.0
    %268 = vmatpush1.msra.mxu0 %v238
    %269 = vmatprep.subr.mxu0 0.0
    %270 = vmatpush1.msra.mxu0 %v239
    %271 = vmatprep.subr.mxu0 0.0
    %272 = vmatpush1.msra.mxu0 %v240
    %273 = vmatprep.subr.mxu0 0.0
    %274 = vmatpush1.msra.mxu0 %v241
    %275 = vmatprep.subr.mxu0 0.0
    %276 = vmatpush1.msra.mxu0 %v242
    %277 = vmatprep.subr.mxu0 0.0
    %278 = vmatpush1.msra.mxu0 %v243
    %279 = vmatprep.subr.mxu0 0.0
    %280 = vmatpush1.msra.mxu0 %v244
    %281 = vmatprep.subr.mxu0 0.0
    %282 = vmatpush1.msra.mxu0 %v245
    %283 = vmatprep.subr.mxu0 0.0
    %284 = vmatpush1.msra.mxu0 0.0
    %285 = vmatprep.subr.mxu0 0.0
    %286 = vmatpush1.msra.mxu0 0.0
    %287 = vmatprep.subr.mxu0 0.0
    %288 = vmatpush1.msra.mxu0 0.0
    %289 = vmatprep.subr.mxu0 0.0
    %290 = vmatpush1.msra.mxu0 0.0
    %291 = vmatprep.subr.mxu0 0.0
    %292 = vmatpush1.msra.mxu0 0.0
    %293 = vmatprep.subr.mxu0 0.0
    %294 = vmatpush1.msra.mxu0 0.0
    %295 = vmatprep.subr.mxu0 0.0
    %296 = vmatpush1.msra.mxu0 0.0
    %297 = vmatprep.subr.mxu0 0.0
    %298 = vmatpush1.msra.mxu0 0.0
    %299 = vmatprep.subr.mxu0 0.0
    %300 = vmatpush1.msra.mxu0 0.0
    %301 = vmatprep.subr.mxu0 0.0
    %302 = vmatpush1.msra.mxu0 0.0
    %303 = vmatprep.subr.mxu0 0.0
    %304 = vmatpush1.msra.mxu0 0.0
    %305 = vmatprep.subr.mxu0 0.0
    %306 = vmatpush1.msra.mxu0 0.0
    %307 = vmatprep.subr.mxu0 0.0
    %308 = vmatpush1.msra.mxu0 0.0
    %309 = vmatprep.subr.mxu0 0.0
    %310 = vmatpush1.msra.mxu0 0.0
    %311 = vmatprep.subr.mxu0 0.0
    %312 = vmatpush1.msra.mxu0 0.0
    %313 = vmatprep.subr.mxu0 0.0
    %314 = vmatpush1.msra.mxu0 0.0
    %315 = vmatprep.mubr.f32.mxu0 0.0
    %316 = vmatmul.mubr.f32.gmra.mrb[0].mxu0 %v229
    %v317 = vpop.f32.mrb[0].mxu0
    %v318 = vadd.f32 %v250, %v317
    %v319 = vpop.f32.mrb[0].mxu0
    %320 = vdwg.mxu0
    %vm321 = vcmp.ge.f32.partialorder %v318, 0.0
    %v322 = vmul.f32 %v318, 0.01
    %v323 = vsel %vm321, %v318, %v322
    %v324 = vld [vmem:[#allocation4 + $0x110] sm:$0xff]
    %v325 = vld [vmem:[#allocation4 + $0x118] sm:$0xff]
    %v326 = vld [vmem:[#allocation4 + $0x120] sm:$0xff]
    %v327 = vld [vmem:[#allocation4 + $0x128] sm:$0xff]
    %v328 = vld [vmem:[#allocation4 + $0x130] sm:$0xff]
    %v329 = vld [vmem:[#allocation4 + $0x138] sm:$0xff]
    %v330 = vld [vmem:[#allocation4 + $0x140] sm:$0xff]
    %v331 = vld [vmem:[#allocation4 + $0x148] sm:$0xff]
    %v332 = vld [vmem:[#allocation4 + $0x150] sm:$0xff]
    %v333 = vld [vmem:[#allocation4 + $0x158] sm:$0xff]
    %v334 = vld [vmem:[#allocation4 + $0x160] sm:$0xff]
    %v335 = vld [vmem:[#allocation4 + $0x168] sm:$0xff]
    %v336 = vld [vmem:[#allocation4 + $0x170] sm:$0xff]
    %v337 = vld [vmem:[#allocation4 + $0x178] sm:$0xff]
    %v338 = vld [vmem:[#allocation4 + $0x180] sm:$0xff]
    %v339 = vld [vmem:[#allocation4 + $0x188] sm:$0xff]
    %v340 = vld [vmem:[#allocation6 + $0x3] sm:$0x1]
    %v341 = vlaneseq
    %v342 = vshrl.u32 %v341, 7
    %v343 = vsub.s32 0, %v342
    %v344 = vrot.slane %v340, %v343
    %345 = vmatprep.subr.mxu0 0.0
    %346 = vmatpush1.msra.mxu0 %v324
    %347 = vmatprep.subr.mxu0 0.0
    %348 = vmatpush1.msra.mxu0 %v325
    %349 = vmatprep.subr.mxu0 0.0
    %350 = vmatpush1.msra.mxu0 %v326
    %351 = vmatprep.subr.mxu0 0.0
    %352 = vmatpush1.msra.mxu0 %v327
    %353 = vmatprep.subr.mxu0 0.0
    %354 = vmatpush1.msra.mxu0 %v328
    %355 = vmatprep.subr.mxu0 0.0
    %356 = vmatpush1.msra.mxu0 %v329
    %357 = vmatprep.subr.mxu0 0.0
    %358 = vmatpush1.msra.mxu0 %v330
    %359 = vmatprep.subr.mxu0 0.0
    %360 = vmatpush1.msra.mxu0 %v331
    %361 = vmatprep.subr.mxu0 0.0
    %362 = vmatpush1.msra.mxu0 %v332
    %363 = vmatprep.subr.mxu0 0.0
    %364 = vmatpush1.msra.mxu0 %v333
    %365 = vmatprep.subr.mxu0 0.0
    %366 = vmatpush1.msra.mxu0 %v334
    %367 = vmatprep.subr.mxu0 0.0
    %368 = vmatpush1.msra.mxu0 %v335
    %369 = vmatprep.subr.mxu0 0.0
    %370 = vmatpush1.msra.mxu0 %v336
    %371 = vmatprep.subr.mxu0 0.0
    %372 = vmatpush1.msra.mxu0 %v337
    %373 = vmatprep.subr.mxu0 0.0
    %374 = vmatpush1.msra.mxu0 %v338
    %375 = vmatprep.subr.mxu0 0.0
    %376 = vmatpush1.msra.mxu0 %v339
    %377 = vmatprep.subr.mxu0 0.0
    %378 = vmatpush1.msra.mxu0 0.0
    %379 = vmatprep.subr.mxu0 0.0
    %380 = vmatpush1.msra.mxu0 0.0
    %381 = vmatprep.subr.mxu0 0.0
    %382 = vmatpush1.msra.mxu0 0.0
    %383 = vmatprep.subr.mxu0 0.0
    %384 = vmatpush1.msra.mxu0 0.0
    %385 = vmatprep.subr.mxu0 0.0
    %386 = vmatpush1.msra.mxu0 0.0
    %387 = vmatprep.subr.mxu0 0.0
    %388 = vmatpush1.msra.mxu0 0.0
    %389 = vmatprep.subr.mxu0 0.0
    %390 = vmatpush1.msra.mxu0 0.0
    %391 = vmatprep.subr.mxu0 0.0
    %392 = vmatpush1.msra.mxu0 0.0
    %393 = vmatprep.subr.mxu0 0.0
    %394 = vmatpush1.msra.mxu0 0.0
    %395 = vmatprep.subr.mxu0 0.0
    %396 = vmatpush1.msra.mxu0 0.0
    %397 = vmatprep.subr.mxu0 0.0
    %398 = vmatpush1.msra.mxu0 0.0
    %399 = vmatprep.subr.mxu0 0.0
    %400 = vmatpush1.msra.mxu0 0.0
    %401 = vmatprep.subr.mxu0 0.0
    %402 = vmatpush1.msra.mxu0 0.0
    %403 = vmatprep.subr.mxu0 0.0
    %404 = vmatpush1.msra.mxu0 0.0
    %405 = vmatprep.subr.mxu0 0.0
    %406 = vmatpush1.msra.mxu0 0.0
    %407 = vmatprep.subr.mxu0 0.0
    %408 = vmatpush1.msra.mxu0 0.0
    %409 = vmatprep.mubr.f32.mxu0 0.0
    %410 = vmatmul.mubr.f32.gmra.mrb[0].mxu0 %v323
    %v411 = vpop.f32.mrb[0].mxu0
    %v412 = vadd.f32 %v344, %v411
    %v413 = vpop.f32.mrb[0].mxu0
    %414 = vdwg.mxu0
    %v415 = vtanh.pop %v412
    %vm416 = vcmask 31744
    %417 = vst.msk [vmem:[%s3] sm:$0xff] %vm416, %v415
    // Predicated region
    $region26: #{tpu_custom_call.1} parent=1 // pred_check
      _
    $region27: #{tpu_custom_call.1} parent=1 // pred_check_branch
      %419 = sbr.rel (0) target = $region29
    $region28: #{tpu_custom_call.1} parent=1 // pred_region
      _
    $region29: #{tpu_custom_call.1} parent=1 // pred_fallthru
      _
    // Predicated region
    $region30: #{tpu_custom_call.1} parent=1 // pred_check
      _
    $region31: #{tpu_custom_call.1} parent=1 // pred_check_branch
      %421 = sbr.rel (0) target = $region33
    $region32: #{tpu_custom_call.1} parent=1 // pred_region
      _
    $region33: #{tpu_custom_call.1} parent=1 // pred_fallthru
      _
    %422 = vsyncpa [#allocation3], 1
    %423 = vsyncpa [#allocation5], 1

</llo_original>
